<compile_context>
chip_gen: v5e
topology: v5e:2x2
jax: 0.10.0
libtpu: 0.0.40
codegen_flags: <defaults>
</compile_context>

<pallas_src>
import functools
import math

import jax
import jax.numpy as jnp
from jax import lax
from jax.experimental import pallas as pl
from jax.experimental.pallas import tpu as pltpu


def _round_up(x, m):
    return ((x + m - 1) // m) * m


def _pick_tile(total, preferred, granule):
    """Largest multiple of `granule` that divides `total` and is <= preferred.

    `total` must itself be a multiple of `granule` (or <= preferred, in which
    case the full extent is used).
    """
    preferred = max(preferred, granule)
    if total <= preferred:
        return total
    best = granule
    t = granule
    while t <= preferred:
        if total % t == 0:
            best = t
        t += granule
    return best


def _vmem_limit(entries):
    """entries: iterable of (block_shape, dtype, n_resident_buffers)."""
    total = 0
    for shape, dtype, nbuf in entries:
        total += math.prod(shape) * jnp.dtype(dtype).itemsize * nbuf
    # headroom for compiler-internal scratch; never request the full physical
    # VMEM (v7x has only 64 MiB per TensorCore).
    return int(min(max(total + (4 << 20), 8 << 20), 56 << 20))


# ---------------------------------------------------------------------------
# Kernels
# ---------------------------------------------------------------------------
def _linear_bias_act_kernel(alpha, mxu_dtype, x_ref, w_ref, b_ref, o_ref, acc_ref):
    """Eval path: out = LeakyReLU(X @ W + b), accumulated over the K grid axis.

    Eval-mode BatchNorm has already been folded into W and b by
    prepare_fc_params, so the epilogue is just bias + LeakyReLU.
    """
    k = pl.program_id(2)

    @pl.when(k == 0)
    def _():
        acc_ref[...] = jnp.zeros_like(acc_ref)

    acc_ref[...] += jnp.dot(x_ref[...].astype(mxu_dtype), w_ref[...],
                            preferred_element_type=jnp.float32)

    @pl.when(k == pl.num_programs(2) - 1)
    def _():
        h = acc_ref[...] + b_ref[...]
        o_ref[...] = jnp.where(h >= 0.0, h, alpha * h).astype(o_ref.dtype)


def _linear_stats_kernel(mxu_dtype, x_ref, w_ref, g_ref, sum_ref, sq_ref, acc_ref):
    """Training pass 1: G = X @ W plus per-channel sum / sum-of-squares.

    Grid = (j, i, k) with j (f_out tiles) outermost: the statistics block
    depends only on j, so all of its read-modify-writes are consecutive.
    Zero-padded rows of X produce all-zero rows of G, so they do not perturb
    the sums (stats are later divided by the true batch size).
    """
    i = pl.program_id(1)
    k = pl.program_id(2)

    @pl.when(k == 0)
    def _():
        acc_ref[...] = jnp.zeros_like(acc_ref)

    acc_ref[...] += jnp.dot(x_ref[...].astype(mxu_dtype), w_ref[...],
                            preferred_element_type=jnp.float32)

    @pl.when(k == pl.num_programs(2) - 1)
    def _():
        g = acc_ref[...]
        g_ref[...] = g
        s = jnp.sum(g, axis=0, keepdims=True)
        ss = jnp.sum(g * g, axis=0, keepdims=True)

        @pl.when(i == 0)
        def _():
            sum_ref[...] = s
            sq_ref[...] = ss

        @pl.when(i > 0)
        def _():
            sum_ref[...] += s
            sq_ref[...] += ss


def _bn_act_kernel(alpha, eps, inv_n, g_ref, sum_ref, sq_ref, gamma_ref, beta_ref,
                   o_ref):
    """Training pass 2: LeakyReLU((G - mean) * gamma * rsqrt(var + eps) + beta).

    The linear bias cancels under batch normalization ((g+b) - mean(g+b) ==
    g - mean(g)), so it never appears in the training path.
    """
    mean = sum_ref[...] * inv_n
    var = jnp.maximum(sq_ref[...] * inv_n - mean * mean, 0.0)
    scale = gamma_ref[...] * lax.rsqrt(var + eps)
    hn = (g_ref[...] - mean) * scale + beta_ref[...]
    o_ref[...] = jnp.where(hn >= 0.0, hn, alpha * hn).astype(o_ref.dtype)


# ---------------------------------------------------------------------------
# Parameter preparation (do ONCE per weight update, cache across forward calls)
# ---------------------------------------------------------------------------
def prepare_fc_params(params, *, training=False, eps=1e-5, tile_k=512,
                      mxu_dtype=jnp.bfloat16):
    """Pad / cast / fold layer parameters once; cache the result.

    Re-doing this per forward call would just add un-hidden XLA passes over W.
    """
    w = params["weight"].astype(jnp.float32)             # (f_in, f_out)
    f_in, f_out = w.shape
    f_out_p = _round_up(f_out, 128)

    gamma = params["gamma"].astype(jnp.float32)
    beta = params["beta"].astype(jnp.float32)
    bias = params["bias"].astype(jnp.float32)

    if training:
        # Training BN subtracts the batch mean -> the linear bias cancels.
        w_eff = w
        bias_eff = jnp.zeros((f_out,), jnp.float32)       # unused in training
    else:
        # Fold eval-mode BN (running stats) into W and the bias:
        #   y = (x@W + b - rm) * g*rsqrt(rv+eps) + beta = x@(W*s) + ((b-rm)*s + beta)
        s = gamma * lax.rsqrt(params["running_var"].astype(jnp.float32) + eps)
        w_eff = w * s[None, :]
        bias_eff = (bias - params["running_mean"].astype(jnp.float32)) * s + beta

    if f_in > tile_k:
        f_in_p = _round_up(f_in, 128)                     # K grid axis will be used
    else:
        f_in_p = f_in                                     # single full-extent K block

    w_p = jnp.pad(w_eff, ((0, f_in_p - f_in), (0, f_out_p - f_out))).astype(mxu_dtype)
    pad_c = ((0, 0), (0, f_out_p - f_out))
    return dict(
        w=w_p,
        bias=jnp.pad(bias_eff.reshape(1, f_out), pad_c),
        gamma=jnp.pad(gamma.reshape(1, f_out), pad_c),
        beta=jnp.pad(beta.reshape(1, f_out), pad_c),
        f_in=f_in, f_out=f_out, f_in_p=f_in_p, f_out_p=f_out_p,
        tile_k=int(tile_k), eps=float(eps), mxu_dtype=mxu_dtype,
        training=bool(training),
    )


# ---------------------------------------------------------------------------
# Forward
# ---------------------------------------------------------------------------
def fully_connected_forward(x, prep, *, alpha=0.01, tile_rows=512, tile_out=512):
    """Forward of Fully_ConnectedLayer (norm=True, use_bias=True).

    prep["training"]=False : BatchNorm1d running stats (folded), Dropout1d = id.
    prep["training"]=True  : BatchNorm1d batch statistics (two-pass tiled).
    # TODO(synk): training-mode Dropout1d (stochastic per-channel zeroing with
    # 1/(1-p) rescale) and running-stat updates are not implemented; dropout
    # here matches the module's eval() behaviour.
    """
    n, f_in = x.shape
    assert f_in == prep["f_in"], "input feature dim does not match prepared params"
    f_out, f_out_p, f_in_p = prep["f_out"], prep["f_out_p"], prep["f_in_p"]
    mxu_dtype = prep["mxu_dtype"]

    # Rows: pad only to the 16-sublane granule (never to a full tile), then
    # pick the largest row tile that divides the padded batch.
    n_p = _round_up(n, 16)
    tm = _pick_tile(n_p, tile_rows, 16)
    tn = _pick_tile(f_out_p, tile_out, 128)
    if f_in <= prep["tile_k"]:
        tk, k_steps = f_in, 1            # full-extent K block, X un-padded along K
    else:
        tk = _pick_tile(f_in_p, prep["tile_k"], 128)
        k_steps = f_in_p // tk

    x_p = x
    if n_p != n or f_in_p != f_in:
        x_p = jnp.pad(x, ((0, n_p - n), (0, f_in_p - f_in)))

    # ------------------------------ eval ------------------------------------
    if not prep["training"]:
        grid = (n_p // tm, f_out_p // tn, k_steps)
        vmem = _vmem_limit([
            ((tm, tk), x_p.dtype, 2), ((tk, tn), mxu_dtype, 2),
            ((1, tn), jnp.float32, 2), ((tm, tn), jnp.float32, 2),
            ((tm, tn), jnp.float32, 1),
        ])
        out = pl.pallas_call(
            functools.partial(_linear_bias_act_kernel, alpha, mxu_dtype),
            out_shape=jax.ShapeDtypeStruct((n_p, f_out_p), jnp.float32),
            grid_spec=pltpu.PrefetchScalarGridSpec(
                num_scalar_prefetch=0,
                grid=grid,
                in_specs=[
                    pl.BlockSpec((tm, tk), lambda i, j, k: (i, k)),      # X tile
                    pl.BlockSpec((tk, tn), lambda i, j, k: (k, j)),      # W tile
                    pl.BlockSpec((1, tn), lambda i, j, k: (0, j)),       # folded bias
                ],
                out_specs=pl.BlockSpec((tm, tn), lambda i, j, k: (i, j)),
                scratch_shapes=[pltpu.VMEM((tm, tn), jnp.float32)],
            ),
            compiler_params=pltpu.CompilerParams(
                dimension_semantics=("parallel", "parallel", "arbitrary"),
                vmem_limit_bytes=vmem),
        )(x_p, prep["w"], prep["bias"])
        return out[:n, :f_out]

    # --------------------------- training: pass 1 ---------------------------
    grid1 = (f_out_p // tn, n_p // tm, k_steps)          # j outermost (see kernel)
    vmem1 = _vmem_limit([
        ((tm, tk), x_p.dtype, 2), ((tk, tn), mxu_dtype, 2),
        ((tm, tn), jnp.float32, 2), ((1, tn), jnp.float32, 4),
        ((tm, tn), jnp.float32, 1),
    ])
    g, col_sum, col_sq = pl.pallas_call(
        functools.partial(_linear_stats_kernel, mxu_dtype),
        out_shape=(jax.ShapeDtypeStruct((n_p, f_out_p), jnp.float32),
                   jax.ShapeDtypeStruct((1, f_out_p), jnp.float32),
                   jax.ShapeDtypeStruct((1, f_out_p), jnp.float32)),
        grid_spec=pltpu.PrefetchScalarGridSpec(
            num_scalar_prefetch=0,
            grid=grid1,
            in_specs=[
                pl.BlockSpec((tm, tk), lambda j, i, k: (i, k)),          # X
                pl.BlockSpec((tk, tn), lambda j, i, k: (k, j)),          # W
            ],
            out_specs=[
                pl.BlockSpec((tm, tn), lambda j, i, k: (i, j)),          # G
                pl.BlockSpec((1, tn), lambda j, i, k: (0, j)),           # sum
                pl.BlockSpec((1, tn), lambda j, i, k: (0, j)),           # sum of sq
            ],
            scratch_shapes=[pltpu.VMEM((tm, tn), jnp.float32)],
        ),
        compiler_params=pltpu.CompilerParams(
            dimension_semantics=("parallel", "arbitrary", "arbitrary"),
            vmem_limit_bytes=vmem1),
    )(x_p, prep["w"])

    # --------------------------- training: pass 2 ---------------------------
    grid2 = (n_p // tm, f_out_p // tn)
    vmem2 = _vmem_limit([
        ((tm, tn), jnp.float32, 2), ((1, tn), jnp.float32, 8),
        ((tm, tn), jnp.float32, 2),
    ])
    out = pl.pallas_call(
        functools.partial(_bn_act_kernel, alpha, prep["eps"], 1.0 / n),
        out_shape=jax.ShapeDtypeStruct((n_p, f_out_p), jnp.float32),
        grid_spec=pltpu.PrefetchScalarGridSpec(
            num_scalar_prefetch=0,
            grid=grid2,
            in_specs=[
                pl.BlockSpec((tm, tn), lambda i, j: (i, j)),             # G
                pl.BlockSpec((1, tn), lambda i, j: (0, j)),              # sum
                pl.BlockSpec((1, tn), lambda i, j: (0, j)),              # sum of sq
                pl.BlockSpec((1, tn), lambda i, j: (0, j)),              # gamma
                pl.BlockSpec((1, tn), lambda i, j: (0, j)),              # beta
            ],
            out_specs=pl.BlockSpec((tm, tn), lambda i, j: (i, j)),
        ),
        compiler_params=pltpu.CompilerParams(
            dimension_semantics=("parallel", "parallel"),
            vmem_limit_bytes=vmem2),
    )(g, col_sum, col_sq, prep["gamma"], prep["beta"])
    return out[:n, :f_out]


# ---------------------------------------------------------------------------
# Pure-JAX reference
# ---------------------------------------------------------------------------
def _reference(x, params, *, training, alpha=0.01, eps=1e-5, mxu_dtype=None):
    """Mirror of the PyTorch module (eval-time dropout = identity).

    mxu_dtype=jnp.bfloat16 mimics the kernel's bf16 MXU operands (tight check);
    mxu_dtype=None is the exact f32 PyTorch math.
    """
    w = params["weight"].astype(jnp.float32)
    b = params["bias"].astype(jnp.float32)
    gamma = params["gamma"].astype(jnp.float32)
    beta = params["beta"].astype(jnp.float32)

    def mm(a, m):
        if mxu_dtype is None:
            return jnp.dot(a, m, precision=lax.Precision.HIGHEST)
        return jnp.dot(a.astype(mxu_dtype), m.astype(mxu_dtype),
                       preferred_element_type=jnp.float32)

    if training:
        h = mm(x, w) + b[None, :]
        mean = jnp.mean(h, axis=0, keepdims=True)
        var = jnp.mean((h - mean) ** 2, axis=0, keepdims=True)
        hn = (h - mean) / jnp.sqrt(var + eps) * gamma[None, :] + beta[None, :]
    else:
        rm = params["running_mean"].astype(jnp.float32)
        rv = params["running_var"].astype(jnp.float32)
        if mxu_dtype is None:
            h = mm(x, w) + b[None, :]
            hn = (h - rm[None, :]) / jnp.sqrt(rv[None, :] + eps) * gamma[None, :] \
                + beta[None, :]
        else:
            # mirror the kernel's fold (BN scale folded into W before the cast)
            s = gamma / jnp.sqrt(rv + eps)
            hn = mm(x, w * s[None, :]) + ((b - rm) * s + beta)[None, :]
    return jnp.where(hn >= 0.0, hn, alpha * hn)


def _make_params(key, f_in, f_out):
    ks = jax.random.split(key, 6)
    return {
        "weight": jax.random.normal(ks[0], (f_in, f_out), jnp.float32) / f_in ** 0.5,
        "bias": jax.random.normal(ks[1], (f_out,), jnp.float32) * 0.1,
        "gamma": jax.random.uniform(ks[2], (f_out,), minval=0.5, maxval=1.5),
        "beta": jax.random.normal(ks[3], (f_out,), jnp.float32) * 0.1,
        "running_mean": jax.random.normal(ks[4], (f_out,), jnp.float32) * 0.1,
        "running_var": jax.random.uniform(ks[5], (f_out,), minval=0.5, maxval=1.5),
    }


if __name__ == "__main__":
    key = jax.random.PRNGKey(0)

    configs = [
        # strict parity path with f32 MXU operands (single block, no tiling)
        dict(n=64, f_in=48, f_out=32, mxu_dtype=jnp.float32,
             tile_rows=512, tile_out=512, tile_k=512, tol=2e-2),
        # bf16 MXU operands + ragged batch (row padding to 16-granule)
        dict(n=50, f_in=48, f_out=32, mxu_dtype=jnp.bfloat16,
             tile_rows=512, tile_out=512, tile_k=512, tol=2e-3),
        # bf16 + row / f_out / K grid tiling all active
        dict(n=160, f_in=256, f_out=384, mxu_dtype=jnp.bfloat16,
             tile_rows=64, tile_out=128, tile_k=128, tol=2e-3),
    ]

    for ci, cfg in enumerate(configs):
        key, kx, kp = jax.random.split(key, 3)
        x = jax.random.normal(kx, (cfg["n"], cfg["f_in"]), jnp.float32)
        params = _make_params(kp, cfg["f_in"], cfg["f_out"])

        for training in (False, True):
            prep = prepare_fc_params(params, training=training,
                                     tile_k=cfg["tile_k"],
                                     mxu_dtype=cfg["mxu_dtype"])
            out = jax.block_until_ready(
                fully_connected_forward(x, prep,
                                        tile_rows=cfg["tile_rows"],
                                        tile_out=cfg["tile_out"]))
            assert out.shape == (cfg["n"], cfg["f_out"])

            ref_dtype = None if cfg["mxu_dtype"] == jnp.float32 else cfg["mxu_dtype"]
            ref = _reference(x, params, training=training, mxu_dtype=ref_dtype)
            assert jnp.allclose(out, ref, atol=cfg["tol"], rtol=cfg["tol"]), \
                f"mismatch (config={ci}, training={training})"

            # loose sanity check against the exact f32 PyTorch math
            ref32 = _reference(x, params, training=training, mxu_dtype=None)
            assert jnp.allclose(out, ref32, atol=1e-1, rtol=1e-1), \
                f"f32 sanity mismatch (config={ci}, training={training})"

    print("KERNEL_OK")
</pallas_src>

<mosaic_0001>
module attributes {stable_mosaic.version = 11 : i64} {
  func.func @_linear_bias_act_kernel(%arg0: i32, %arg1: i32, %arg2: i32, %arg3: memref<64x48xf32, #tpu.memory_space<vmem>>, %arg4: memref<48x128xf32, #tpu.memory_space<vmem>>, %arg5: memref<1x128xf32, #tpu.memory_space<vmem>>, %arg6: memref<64x128xf32, #tpu.memory_space<vmem>>, %arg7: memref<64x128xf32, #tpu.memory_space<vmem>>) attributes {dimension_semantics = [#tpu.dimension_semantics<parallel>, #tpu.dimension_semantics<parallel>, #tpu.dimension_semantics<arbitrary>], iteration_bounds = array<i64: 1, 1, 1>, scalar_prefetch = 0 : i64, scratch_operands = 1 : i64, tpu.core_type = #tpu.core_type<tc>, window_params = [{transform_indices = @transform_0, window_bounds = array<i64: 64, 48>}, {transform_indices = @transform_1, window_bounds = array<i64: 48, 128>}, {transform_indices = @transform_2, window_bounds = array<i64: 1, 128>}, {transform_indices = @transform_3, window_bounds = array<i64: 64, 128>}]} {
    %c0_i32 = arith.constant 0 : i32
    %0 = arith.cmpi eq, %arg2, %c0_i32 : i32
    %1 = arith.extui %0 : i1 to i32
    %c0_i32_0 = arith.constant 0 : i32
    %2 = arith.cmpi ne, %1, %c0_i32_0 : i32
    scf.if %2 {
      %cst_10 = arith.constant 0.000000e+00 : f32
      %12 = vector.broadcast %cst_10 : f32 to vector<64x128xf32>
      %c0_11 = arith.constant 0 : index
      %c0_12 = arith.constant 0 : index
      %13 = vector.load %arg7[%c0_11, %c0_12] : memref<64x128xf32, #tpu.memory_space<vmem>>, vector<64x128xf32>
      tpu.vector_store %arg7[%c0_11, %c0_12], %12 {strides = array<i32>} : memref<64x128xf32, #tpu.memory_space<vmem>>, vector<64x128xf32>,
    } else {
    }
    %c0 = arith.constant 0 : index
    %c0_1 = arith.constant 0 : index
    %3 = vector.load %arg7[%c0, %c0_1] : memref<64x128xf32, #tpu.memory_space<vmem>>, vector<64x128xf32>
    %c0_2 = arith.constant 0 : index
    %c0_3 = arith.constant 0 : index
    %4 = vector.load %arg3[%c0_2, %c0_3] : memref<64x48xf32, #tpu.memory_space<vmem>>, vector<64x48xf32>
    %c0_4 = arith.constant 0 : index
    %c0_5 = arith.constant 0 : index
    %5 = vector.load %arg4[%c0_4, %c0_5] : memref<48x128xf32, #tpu.memory_space<vmem>>, vector<48x128xf32>
    %cst = arith.constant dense<0.000000e+00> : vector<64x128xf32>
    %6 = tpu.matmul %4, %5, %cst {dimension_numbers = #tpu.dot_dimension_numbers<[1], [0], [0], [1], [0, 0, 1, 1], [], []>} : vector<64x48xf32>, vector<48x128xf32>, vector<64x128xf32> -> vector<64x128xf32>
    %7 = arith.addf %3, %6 : vector<64x128xf32>
    %c0_6 = arith.constant 0 : index
    %c0_7 = arith.constant 0 : index
    %8 = vector.load %arg7[%c0_6, %c0_7] : memref<64x128xf32, #tpu.memory_space<vmem>>, vector<64x128xf32>
    tpu.vector_store %arg7[%c0_6, %c0_7], %7 {strides = array<i32>} : memref<64x128xf32, #tpu.memory_space<vmem>>, vector<64x128xf32>,
    %c0_i32_8 = arith.constant 0 : i32
    %9 = arith.cmpi eq, %arg2, %c0_i32_8 : i32
    %10 = arith.extui %9 : i1 to i32
    %c0_i32_9 = arith.constant 0 : i32
    %11 = arith.cmpi ne, %10, %c0_i32_9 : i32
    scf.if %11 {
      %c0_10 = arith.constant 0 : index
      %c0_11 = arith.constant 0 : index
      %12 = vector.load %arg7[%c0_10, %c0_11] : memref<64x128xf32, #tpu.memory_space<vmem>>, vector<64x128xf32>
      %c0_12 = arith.constant 0 : index
      %c0_13 = arith.constant 0 : index
      %13 = vector.load %arg5[%c0_12, %c0_13] : memref<1x128xf32, #tpu.memory_space<vmem>>, vector<1x128xf32>
      %14 = vector.broadcast %13 : vector<1x128xf32> to vector<64x128xf32>
      %15 = arith.addf %12, %14 : vector<64x128xf32>
      %cst_14 = arith.constant 0.000000e+00 : f32
      %16 = vector.broadcast %cst_14 : f32 to vector<64x128xf32>
      %17 = arith.cmpf oge, %15, %16 : vector<64x128xf32>
      %cst_15 = arith.constant 0.00999999977 : f32
      %18 = vector.broadcast %cst_15 : f32 to vector<64x128xf32>
      %19 = arith.mulf %18, %15 : vector<64x128xf32>
      %20 = arith.select %17, %15, %19 : vector<64x128xi1>, vector<64x128xf32>
      %c0_16 = arith.constant 0 : index
      %c0_17 = arith.constant 0 : index
      %21 = vector.load %arg6[%c0_16, %c0_17] : memref<64x128xf32, #tpu.memory_space<vmem>>, vector<64x128xf32>
      tpu.vector_store %arg6[%c0_16, %c0_17], %20 {strides = array<i32>} : memref<64x128xf32, #tpu.memory_space<vmem>>, vector<64x128xf32>,
    } else {
    }
    return
  }
  func.func @transform_0(%arg0: i32, %arg1: i32, %arg2: i32) -> (i32, i32) {
    %c0_i32 = arith.constant 0 : i32
    return %arg0, %arg2 : i32, i32
  }
  func.func @transform_1(%arg0: i32, %arg1: i32, %arg2: i32) -> (i32, i32) {
    %c0_i32 = arith.constant 0 : i32
    return %arg2, %arg1 : i32, i32
  }
  func.func @transform_2(%arg0: i32, %arg1: i32, %arg2: i32) -> (i32, i32) {
    %c0_i32 = arith.constant 0 : i32
    %c0_i32_0 = arith.constant 0 : i32
    return %c0_i32, %arg1 : i32, i32
  }
  func.func @transform_3(%arg0: i32, %arg1: i32, %arg2: i32) -> (i32, i32) {
    %c0_i32 = arith.constant 0 : i32
    return %arg0, %arg1 : i32, i32
  }
}

</mosaic_0001>

<llo_original>
// kernel: tpu_custom_call.1
$region0: #{tpu_custom_call.1}
  #allocation0 [shape = 'u32[]', space=smem, size = 0x4, offset = 0x4, fixed_abs, tag = 'smem constant byte address 0x4 - core index']
  #allocation1 [shape = 'u32[72,128]{1,0:T(1,128)}', space=vmem, size = 0x9000, scoped, tag = 'internal scratch']
  #allocation2 [shape = 'f32[64,128]{1,0:T(8,128)}', space=vmem, size = 0x8000, scoped, tag = 'scratch operand']
  %s0 = inlined_call_operand.vmem [shape: f32[64,48], index: 0, kind: input, shape index: {}]
  %s1 = inlined_call_operand.vmem [shape: f32[48,128], index: 1, kind: input, shape index: {}]
  %s2 = inlined_call_operand.vmem [shape: f32[1,128], index: 2, kind: input, shape index: {}]
  %s3 = inlined_call_operand.hbm [shape: f32[64,128], index: 3, kind: output, shape index: {}]
  %s4 = sld [smem:[#allocation0]]
  $region30: #{tpu_custom_call.1} parent=0
    _
  %s6 = ssub.s32 1, %s4
  %s7 = scalar_select 0, %s6, %s4
  $region1: #{tpu_custom_call.1} parent=0
    #allocation3 [shape = 'u8[32768]{0}', space=vmem, size = 0x8000, scoped, tag = 'output window, operand 0, single buffered']
    #allocation4 [shape = 's32[1]{0}', space=sflag, size = 0x4, scoped, tag = 'scoped memory for tpu_custom_call.1']
    %8 = vsyncpa [#allocation4], 0
    // Predicated region
    $region2: #{tpu_custom_call.1} parent=1 // pred_check
      _
    $region3: #{tpu_custom_call.1} parent=1 // pred_check_branch
      %10 = sbr.rel (0) target = $region5
    $region4: #{tpu_custom_call.1} parent=1 // pred_region
      _
    $region5: #{tpu_custom_call.1} parent=1 // pred_fallthru
      _
    // Predicated region
    $region6: #{tpu_custom_call.1} parent=1 // pred_check
      _
    $region7: #{tpu_custom_call.1} parent=1 // pred_check_branch
      %12 = sbr.rel (0) target = $region9
    $region8: #{tpu_custom_call.1} parent=1 // pred_region
      _
    $region9: #{tpu_custom_call.1} parent=1 // pred_fallthru
      _
    // Predicated region
    $region10: #{tpu_custom_call.1} parent=1 // pred_check
      _
    $region11: #{tpu_custom_call.1} parent=1 // pred_check_branch
      %14 = sbr.rel (0) target = $region13
    $region12: #{tpu_custom_call.1} parent=1 // pred_region
      _
    $region13: #{tpu_custom_call.1} parent=1 // pred_fallthru
      _
    %p15 = scmp.eq.s32.totalorder 0, 0
    // Predicated region
    $region14: #{tpu_custom_call.1} parent=1 // pred_check
      %p16 = pneg %p15
    $region15: #{tpu_custom_call.1} parent=1 // pred_check_branch
      %18 = sbr.rel (%p16) target = $region17
    $region16: #{tpu_custom_call.1} parent=1 // pred_region
      %19 = vst [vmem:[#allocation2] sm:$0xff] 0.0
      %20 = vst [vmem:[#allocation2 + $0x8] sm:$0xff] 0.0
      %21 = vst [vmem:[#allocation2 + $0x10] sm:$0xff] 0.0
      %22 = vst [vmem:[#allocation2 + $0x18] sm:$0xff] 0.0
      %23 = vst [vmem:[#allocation2 + $0x20] sm:$0xff] 0.0
      %24 = vst [vmem:[#allocation2 + $0x28] sm:$0xff] 0.0
      %25 = vst [vmem:[#allocation2 + $0x30] sm:$0xff] 0.0
      %26 = vst [vmem:[#allocation2 + $0x38] sm:$0xff] 0.0
    $region17: #{tpu_custom_call.1} parent=1 // pred_fallthru
      _
    %v27 = vld [vmem:[#allocation2] sm:$0xff]
    %v28 = vld [vmem:[#allocation2 + $0x8] sm:$0xff]
    %v29 = vld [vmem:[#allocation2 + $0x10] sm:$0xff]
    %v30 = vld [vmem:[#allocation2 + $0x18] sm:$0xff]
    %v31 = vld [vmem:[#allocation2 + $0x20] sm:$0xff]
    %v32 = vld [vmem:[#allocation2 + $0x28] sm:$0xff]
    %v33 = vld [vmem:[#allocation2 + $0x30] sm:$0xff]
    %v34 = vld [vmem:[#allocation2 + $0x38] sm:$0xff]
    %v35 = vld [vmem:[%s0] sm:$0xff]
    %v36 = vld [vmem:[%s0 + $0x8] sm:$0xff]
    %v37 = vld [vmem:[%s0 + $0x10] sm:$0xff]
    %v38 = vld [vmem:[%s0 + $0x18] sm:$0xff]
    %v39 = vld [vmem:[%s0 + $0x20] sm:$0xff]
    %v40 = vld [vmem:[%s0 + $0x28] sm:$0xff]
    %v41 = vld [vmem:[%s0 + $0x30] sm:$0xff]
    %v42 = vld [vmem:[%s0 + $0x38] sm:$0xff]
    %v43 = vld [vmem:[%s1] sm:$0xff]
    %v44 = vld [vmem:[%s1 + $0x8] sm:$0xff]
    %v45 = vld [vmem:[%s1 + $0x10] sm:$0xff]
    %v46 = vld [vmem:[%s1 + $0x18] sm:$0xff]
    %v47 = vld [vmem:[%s1 + $0x20] sm:$0xff]
    %v48 = vld [vmem:[%s1 + $0x28] sm:$0xff]
    %vm49 = vcmask 392192
    %v51 = vsel %vm49, %v35, 0
    %v54 = vsel %vm49, %v36, 0
    %v57 = vsel %vm49, %v37, 0
    %v60 = vsel %vm49, %v38, 0
    %v63 = vsel %vm49, %v39, 0
    %v66 = vsel %vm49, %v40, 0
    %v69 = vsel %vm49, %v41, 0
    %v72 = vsel %vm49, %v42, 0
    %74 = vmatpush.msra.mxu0 0.0
    %75 = vmatpush.msra.mxu0 0.0
    %76 = vmatpush.msra.mxu0 0.0
    %77 = vmatpush.msra.mxu0 0.0
    %78 = vmatpush.msra.mxu0 0.0
    %79 = vmatpush.msra.mxu0 0.0
    %80 = vmatpush.msra.mxu0 0.0
    %81 = vmatpush.msra.mxu0 0.0
    %82 = vmatpush.msra.mxu0 0.0
    %83 = vmatpush.msra.mxu0 0.0
    %84 = vmatpush.msra.mxu0 %v48
    %85 = vmatpush.msra.mxu0 %v47
    %86 = vmatpush.msra.mxu0 %v46
    %87 = vmatpush.msra.mxu0 %v45
    %88 = vmatpush.msra.mxu0 %v44
    %89 = vmatpush.msra.mxu0 %v43
    %90 = vmatmul.f32.gmra.mxu0 %v51
    %v91 = vpop.f32.mrf.mxu0
    %v92 = vadd.f32 0.0, %v91
    %93 = vmatmul.f32.gmra.mxu0 %v54
    %v94 = vpop.f32.mrf.mxu0
    %v95 = vadd.f32 0.0, %v94
    %96 = vmatmul.f32.gmra.mxu0 %v57
    %v97 = vpop.f32.mrf.mxu0
    %v98 = vadd.f32 0.0, %v97
    %99 = vmatmul.f32.gmra.mxu0 %v60
    %v100 = vpop.f32.mrf.mxu0
    %v101 = vadd.f32 0.0, %v100
    %102 = vmatmul.f32.gmra.mxu0 %v63
    %v103 = vpop.f32.mrf.mxu0
    %v104 = vadd.f32 0.0, %v103
    %105 = vmatmul.f32.gmra.mxu0 %v66
    %v106 = vpop.f32.mrf.mxu0
    %v107 = vadd.f32 0.0, %v106
    %108 = vmatmul.f32.gmra.mxu0 %v69
    %v109 = vpop.f32.mrf.mxu0
    %v110 = vadd.f32 0.0, %v109
    %111 = vmatmul.f32.gmra.mxu0 %v72
    %v112 = vpop.f32.mrf.mxu0
    %v113 = vadd.f32 0.0, %v112
    %114 = vdwg.mxu0
    %v115 = vadd.f32 %v27, %v92
    %v116 = vadd.f32 %v28, %v95
    %v117 = vadd.f32 %v29, %v98
    %v118 = vadd.f32 %v30, %v101
    %v119 = vadd.f32 %v31, %v104
    %v120 = vadd.f32 %v32, %v107
    %v121 = vadd.f32 %v33, %v110
    %v122 = vadd.f32 %v34, %v113
    %123 = vst [vmem:[#allocation2] sm:$0xff] %v115
    %124 = vst [vmem:[#allocation2 + $0x8] sm:$0xff] %v116
    %125 = vst [vmem:[#allocation2 + $0x10] sm:$0xff] %v117
    %126 = vst [vmem:[#allocation2 + $0x18] sm:$0xff] %v118
    %127 = vst [vmem:[#allocation2 + $0x20] sm:$0xff] %v119
    %128 = vst [vmem:[#allocation2 + $0x28] sm:$0xff] %v120
    %129 = vst [vmem:[#allocation2 + $0x30] sm:$0xff] %v121
    %130 = vst [vmem:[#allocation2 + $0x38] sm:$0xff] %v122
    // Predicated region
    $region18: #{tpu_custom_call.1} parent=1 // pred_check
      %p131 = pneg %p15
    $region19: #{tpu_custom_call.1} parent=1 // pred_check_branch
      %133 = sbr.rel (%p131) target = $region21
    $region20: #{tpu_custom_call.1} parent=1 // pred_region
      %v134 = vld [vmem:[#allocation2] sm:$0xff]
      %v135 = vld [vmem:[#allocation2 + $0x8] sm:$0xff]
      %v136 = vld [vmem:[#allocation2 + $0x10] sm:$0xff]
      %v137 = vld [vmem:[#allocation2 + $0x18] sm:$0xff]
      %v138 = vld [vmem:[#allocation2 + $0x20] sm:$0xff]
      %v139 = vld [vmem:[#allocation2 + $0x28] sm:$0xff]
      %v140 = vld [vmem:[#allocation2 + $0x30] sm:$0xff]
      %v141 = vld [vmem:[#allocation2 + $0x38] sm:$0xff]
      %v142 = vld [vmem:[%s2] sm:$0x1]
      %v144 = vperm.slane %v142, 0
      %v146 = vadd.f32 %v134, %v144
      %v147 = vadd.f32 %v135, %v144
      %v148 = vadd.f32 %v136, %v144
      %v149 = vadd.f32 %v137, %v144
      %v150 = vadd.f32 %v138, %v144
      %v151 = vadd.f32 %v139, %v144
      %v152 = vadd.f32 %v140, %v144
      %v153 = vadd.f32 %v141, %v144
      %vm154 = vcmp.ge.f32.partialorder %v146, 0.0
      %vm155 = vcmp.ge.f32.partialorder %v147, 0.0
      %vm156 = vcmp.ge.f32.partialorder %v148, 0.0
      %vm157 = vcmp.ge.f32.partialorder %v149, 0.0
      %vm158 = vcmp.ge.f32.partialorder %v150, 0.0
      %vm159 = vcmp.ge.f32.partialorder %v151, 0.0
      %vm160 = vcmp.ge.f32.partialorder %v152, 0.0
      %vm161 = vcmp.ge.f32.partialorder %v153, 0.0
      %v162 = vmul.f32 %v146, 0.01
      %v163 = vmul.f32 %v147, 0.01
      %v164 = vmul.f32 %v148, 0.01
      %v165 = vmul.f32 %v149, 0.01
      %v166 = vmul.f32 %v150, 0.01
      %v167 = vmul.f32 %v151, 0.01
      %v168 = vmul.f32 %v152, 0.01
      %v169 = vmul.f32 %v153, 0.01
      %v170 = vsel %vm154, %v146, %v162
      %v171 = vsel %vm155, %v147, %v163
      %v172 = vsel %vm156, %v148, %v164
      %v173 = vsel %vm157, %v149, %v165
      %v174 = vsel %vm158, %v150, %v166
      %v175 = vsel %vm159, %v151, %v167
      %v176 = vsel %vm160, %v152, %v168
      %v177 = vsel %vm161, %v153, %v169
      %178 = vst [vmem:[#allocation3] sm:$0xff] %v170
      %179 = vst [vmem:[#allocation3 + $0x8] sm:$0xff] %v171
      %180 = vst [vmem:[#allocation3 + $0x10] sm:$0xff] %v172
      %181 = vst [vmem:[#allocation3 + $0x18] sm:$0xff] %v173
      %182 = vst [vmem:[#allocation3 + $0x20] sm:$0xff] %v174
      %183 = vst [vmem:[#allocation3 + $0x28] sm:$0xff] %v175
      %184 = vst [vmem:[#allocation3 + $0x30] sm:$0xff] %v176
      %185 = vst [vmem:[#allocation3 + $0x38] sm:$0xff] %v177
    $region21: #{tpu_custom_call.1} parent=1 // pred_fallthru
      _
    // Predicated region
    $region22: #{tpu_custom_call.1} parent=1 // pred_check
      _
    $region23: #{tpu_custom_call.1} parent=1 // pred_check_branch
      %187 = sbr.rel (0) target = $region25
    $region24: #{tpu_custom_call.1} parent=1 // pred_region
      %189 = vsyncadd [#allocation4], 0
      %s190 = sshll.u32 [#allocation3], 4
      %s191 = int_to_ptr.vmem [resolvable:$true] %s190
      %s192 = sshll.u32 %s3, 4
      %s193 = int_to_ptr.hbm [resolvable:$true] %s192
      %198 = dma.vmem_to_hbm [thread:$0]  %s191, 1024, %s193, [#allocation4], 128, 128, 8
    $region25: #{tpu_custom_call.1} parent=1 // pred_fallthru
      _
    // Predicated region
    $region26: #{tpu_custom_call.1} parent=1 // pred_check
      _
    $region27: #{tpu_custom_call.1} parent=1 // pred_check_branch
      %200 = sbr.rel (0) target = $region29
    $region28: #{tpu_custom_call.1} parent=1 // pred_region
      %202 = dma.done [#allocation4], 1024
    $region29: #{tpu_custom_call.1} parent=1 // pred_fallthru
      _
    %203 = vsyncpa [#allocation4], 1

</llo_original>
